<compile_context>
chip_gen: v6e
topology: v6e:2x2x1
jax: 0.10.0
libtpu: 0.0.40
codegen_flags: <defaults>
</compile_context>

<pallas_src>
import functools

import jax
import jax.numpy as jnp
from jax.experimental import pallas as pl
from jax.experimental.pallas import tpu as pltpu

NEG_SLOPE = 0.01      # nn.LeakyReLU default negative_slope

IN_F = 256            # fc1 input features
H1, H2, H3 = 120, 84, 10          # true PyTorch feature sizes
H1P = H2P = H3P = 128             # lane-dense (multiple-of-128) padded sizes

DEFAULT_TB = 1024     # batch tile: multiple of 256 (v6e/v7x MXU) and 128 (v5e);
                      # per-tile VMEM ~2.5 MB double-buffered -> safe on all gens.


def _leaky_relu(x):
    return jnp.where(x > 0, x, NEG_SLOPE * x)


def _round_up(n, m):
    return ((n + m - 1) // m) * m


# ---------------------------------------------------------------------------
# Kernel: one batch tile [TB, 256] -> out2 [TB, 128], out3 [TB, 128]
# ---------------------------------------------------------------------------
def mlp_kernel(x_ref, w1_ref, b1_ref, w2_ref, b2_ref, w3_ref, b3_ref,
               out2_ref, out3_ref):
    x = x_ref[...]                                   # bf16 [TB, 256]

    # fc1 + LeakyReLU (dropout == identity in eval mode)
    h1 = jnp.dot(x, w1_ref[...], preferred_element_type=jnp.float32)
    h1 = _leaky_relu(h1 + b1_ref[...])               # f32 [TB, 128]

    # fc2 + LeakyReLU
    h2 = jnp.dot(h1.astype(w2_ref.dtype), w2_ref[...],
                 preferred_element_type=jnp.float32)
    h2 = _leaky_relu(h2 + b2_ref[...])               # f32 [TB, 128]
    out2_ref[...] = h2.astype(out2_ref.dtype)

    # fc3 + LeakyReLU
    h3 = jnp.dot(h2.astype(w3_ref.dtype), w3_ref[...],
                 preferred_element_type=jnp.float32)
    out3_ref[...] = _leaky_relu(h3 + b3_ref[...]).astype(out3_ref.dtype)


# ---------------------------------------------------------------------------
# Parameter packing: PyTorch layout [out, in] -> padded [in, out_pad] bf16
# ---------------------------------------------------------------------------
def pack_params(params, compute_dtype=jnp.bfloat16):
    w1, b1, w2, b2, w3, b3 = params  # PyTorch layout: w [out, in], b [out]

    def pack_w(w, in_pad, out_pad):
        out_f, in_f = w.shape
        wt = w.T.astype(compute_dtype)               # [in, out]
        return jnp.pad(wt, ((0, in_pad - in_f), (0, out_pad - out_f)))

    def pack_b(b, out_pad):
        return jnp.pad(b.astype(jnp.float32), (0, out_pad - b.shape[0]))[None, :]

    return (pack_w(w1, IN_F, H1P), pack_b(b1, H1P),
            pack_w(w2, H1P,  H2P), pack_b(b2, H2P),
            pack_w(w3, H2P,  H3P), pack_b(b3, H3P))


# ---------------------------------------------------------------------------
# Wrapper
# ---------------------------------------------------------------------------
@functools.partial(jax.jit, static_argnames=("tb", "compute_dtype"))
def classifier_forward(x, params, *, tb=DEFAULT_TB,
                       compute_dtype=jnp.bfloat16):
    """x: [B, 256]. params in PyTorch layout. Returns (out2 [B,84], out3 [B,10])."""
    w1p, b1p, w2p, b2p, w3p, b3p = pack_params(params, compute_dtype)

    B = x.shape[0]
    # Clamp the tile for tiny batches; keep it a multiple of 8 (sublane rule).
    tb_eff = min(tb, _round_up(max(B, 1), 8))
    Bp = _round_up(B, tb_eff)
    xp = jnp.pad(x.astype(compute_dtype), ((0, Bp - B), (0, 0)))

    num_tiles = Bp // tb_eff

    full = lambda a: pl.BlockSpec(a.shape, lambda i: (0,) * a.ndim)

    out_shapes = (
        jax.ShapeDtypeStruct((Bp, H2P), jnp.float32),
        jax.ShapeDtypeStruct((Bp, H3P), jnp.float32),
    )
    out_specs = (
        pl.BlockSpec((tb_eff, H2P), lambda i: (i, 0)),
        pl.BlockSpec((tb_eff, H3P), lambda i: (i, 0)),
    )
    in_specs = [
        pl.BlockSpec((tb_eff, IN_F), lambda i: (i, 0)),   # x (batch-tiled)
        full(w1p), full(b1p),                             # weights/biases stay
        full(w2p), full(b2p),                             # VMEM-resident
        full(w3p), full(b3p),
    ]

    o2p, o3p = pl.pallas_call(
        mlp_kernel,
        out_shape=out_shapes,
        grid=(num_tiles,),
        in_specs=in_specs,
        out_specs=out_specs,
        compiler_params=pltpu.CompilerParams(
            dimension_semantics=("parallel",),
        ),
    )(xp, w1p, b1p, w2p, b2p, w3p, b3p)

    return o2p[:B, :H2], o3p[:B, :H3]


# ---------------------------------------------------------------------------
# Deterministic synthetic params (PyTorch nn.Linear layout) + JAX reference
# ---------------------------------------------------------------------------
def init_params(key):
    k = jax.random.split(key, 6)
    w1 = jax.random.normal(k[0], (H1, IN_F), jnp.float32) * 0.05
    b1 = jax.random.normal(k[1], (H1,), jnp.float32) * 0.05
    w2 = jax.random.normal(k[2], (H2, H1), jnp.float32) * 0.05
    b2 = jax.random.normal(k[3], (H2,), jnp.float32) * 0.05
    w3 = jax.random.normal(k[4], (H3, H2), jnp.float32) * 0.05
    b3 = jax.random.normal(k[5], (H3,), jnp.float32) * 0.05
    return (w1, b1, w2, b2, w3, b3)


def reference_forward(x, params, compute_dtype=jnp.bfloat16):
    """Pure-JAX reference with the same bf16-input / f32-accum numerics."""
    w1, b1, w2, b2, w3, b3 = params

    def lin(h, w, b):
        y = jnp.dot(h.astype(compute_dtype), w.T.astype(compute_dtype),
                    preferred_element_type=jnp.float32) + b
        return _leaky_relu(y)

    h1 = lin(x, w1, b1)
    h2 = lin(h1, w2, b2)
    h3 = lin(h2, w3, b3)
    return h2, h3


if __name__ == "__main__":
    key = jax.random.PRNGKey(0)
    kx, kp = jax.random.split(key)

    B = 8
    x = jax.random.normal(kx, (B, IN_F), jnp.float32)
    params = init_params(kp)

    out2, out3 = classifier_forward(x, params)
    jax.block_until_ready((out2, out3))

    ref2, ref3 = reference_forward(x, params)
    assert out2.shape == (B, H2) and out3.shape == (B, H3)
    assert jnp.allclose(out2, ref2, atol=1e-2, rtol=1e-2), \
        float(jnp.max(jnp.abs(out2 - ref2)))
    assert jnp.allclose(out3, ref3, atol=1e-2, rtol=1e-2), \
        float(jnp.max(jnp.abs(out3 - ref3)))

    print("KERNEL_OK")
</pallas_src>

<mosaic_0001>
module attributes {stable_mosaic.version = 11 : i64} {
  func.func @mlp_kernel(%arg0: i32, %arg1: memref<8x256xbf16, #tpu.memory_space<vmem>>, %arg2: memref<256x128xbf16, #tpu.memory_space<vmem>>, %arg3: memref<1x128xf32, #tpu.memory_space<vmem>>, %arg4: memref<128x128xbf16, #tpu.memory_space<vmem>>, %arg5: memref<1x128xf32, #tpu.memory_space<vmem>>, %arg6: memref<128x128xbf16, #tpu.memory_space<vmem>>, %arg7: memref<1x128xf32, #tpu.memory_space<vmem>>, %arg8: memref<8x128xf32, #tpu.memory_space<vmem>>, %arg9: memref<8x128xf32, #tpu.memory_space<vmem>>) attributes {dimension_semantics = [#tpu.dimension_semantics<parallel>], iteration_bounds = array<i64: 1>, scalar_prefetch = 0 : i64, scratch_operands = 0 : i64, tpu.core_type = #tpu.core_type<tc>, window_params = [{transform_indices = @transform_0, window_bounds = array<i64: 8, 256>}, {pipeline_mode = #tpu.pipeline_mode<synchronous>, transform_indices = @transform_1, window_bounds = array<i64: 256, 128>}, {pipeline_mode = #tpu.pipeline_mode<synchronous>, transform_indices = @transform_2, window_bounds = array<i64: 1, 128>}, {pipeline_mode = #tpu.pipeline_mode<synchronous>, transform_indices = @transform_3, window_bounds = array<i64: 128, 128>}, {pipeline_mode = #tpu.pipeline_mode<synchronous>, transform_indices = @transform_4, window_bounds = array<i64: 1, 128>}, {pipeline_mode = #tpu.pipeline_mode<synchronous>, transform_indices = @transform_5, window_bounds = array<i64: 128, 128>}, {pipeline_mode = #tpu.pipeline_mode<synchronous>, transform_indices = @transform_6, window_bounds = array<i64: 1, 128>}, {transform_indices = @transform_7, window_bounds = array<i64: 8, 128>}, {transform_indices = @transform_8, window_bounds = array<i64: 8, 128>}]} {
    %c0 = arith.constant 0 : index
    %c0_0 = arith.constant 0 : index
    %0 = vector.load %arg1[%c0, %c0_0] : memref<8x256xbf16, #tpu.memory_space<vmem>>, vector<8x256xbf16>
    %c0_1 = arith.constant 0 : index
    %c0_2 = arith.constant 0 : index
    %1 = vector.load %arg2[%c0_1, %c0_2] : memref<256x128xbf16, #tpu.memory_space<vmem>>, vector<256x128xbf16>
    %cst = arith.constant dense<0.000000e+00> : vector<8x128xf32>
    %2 = tpu.matmul %0, %1, %cst {dimension_numbers = #tpu.dot_dimension_numbers<[1], [0], [0], [1], [0, 0, 1, 1], [], []>} : vector<8x256xbf16>, vector<256x128xbf16>, vector<8x128xf32> -> vector<8x128xf32>
    %c0_3 = arith.constant 0 : index
    %c0_4 = arith.constant 0 : index
    %3 = vector.load %arg3[%c0_3, %c0_4] : memref<1x128xf32, #tpu.memory_space<vmem>>, vector<1x128xf32>
    %4 = vector.broadcast %3 : vector<1x128xf32> to vector<8x128xf32>
    %5 = arith.addf %2, %4 : vector<8x128xf32>
    %cst_5 = arith.constant 0.000000e+00 : f32
    %6 = vector.broadcast %cst_5 : f32 to vector<8x128xf32>
    %7 = arith.cmpf ogt, %5, %6 : vector<8x128xf32>
    %cst_6 = arith.constant 0.00999999977 : f32
    %8 = vector.broadcast %cst_6 : f32 to vector<8x128xf32>
    %9 = arith.mulf %8, %5 : vector<8x128xf32>
    %10 = arith.select %7, %5, %9 : vector<8x128xi1>, vector<8x128xf32>
    %11 = arith.truncf %10 : vector<8x128xf32> to vector<8x128xbf16>
    %c0_7 = arith.constant 0 : index
    %c0_8 = arith.constant 0 : index
    %12 = vector.load %arg4[%c0_7, %c0_8] : memref<128x128xbf16, #tpu.memory_space<vmem>>, vector<128x128xbf16>
    %cst_9 = arith.constant dense<0.000000e+00> : vector<8x128xf32>
    %13 = tpu.matmul %11, %12, %cst_9 {dimension_numbers = #tpu.dot_dimension_numbers<[1], [0], [0], [1], [0, 0, 1, 1], [], []>} : vector<8x128xbf16>, vector<128x128xbf16>, vector<8x128xf32> -> vector<8x128xf32>
    %c0_10 = arith.constant 0 : index
    %c0_11 = arith.constant 0 : index
    %14 = vector.load %arg5[%c0_10, %c0_11] : memref<1x128xf32, #tpu.memory_space<vmem>>, vector<1x128xf32>
    %15 = vector.broadcast %14 : vector<1x128xf32> to vector<8x128xf32>
    %16 = arith.addf %13, %15 : vector<8x128xf32>
    %cst_12 = arith.constant 0.000000e+00 : f32
    %17 = vector.broadcast %cst_12 : f32 to vector<8x128xf32>
    %18 = arith.cmpf ogt, %16, %17 : vector<8x128xf32>
    %cst_13 = arith.constant 0.00999999977 : f32
    %19 = vector.broadcast %cst_13 : f32 to vector<8x128xf32>
    %20 = arith.mulf %19, %16 : vector<8x128xf32>
    %21 = arith.select %18, %16, %20 : vector<8x128xi1>, vector<8x128xf32>
    %c0_14 = arith.constant 0 : index
    %c0_15 = arith.constant 0 : index
    %22 = vector.load %arg8[%c0_14, %c0_15] : memref<8x128xf32, #tpu.memory_space<vmem>>, vector<8x128xf32>
    tpu.vector_store %arg8[%c0_14, %c0_15], %21 {strides = array<i32>} : memref<8x128xf32, #tpu.memory_space<vmem>>, vector<8x128xf32>,
    %23 = arith.truncf %21 : vector<8x128xf32> to vector<8x128xbf16>
    %c0_16 = arith.constant 0 : index
    %c0_17 = arith.constant 0 : index
    %24 = vector.load %arg6[%c0_16, %c0_17] : memref<128x128xbf16, #tpu.memory_space<vmem>>, vector<128x128xbf16>
    %cst_18 = arith.constant dense<0.000000e+00> : vector<8x128xf32>
    %25 = tpu.matmul %23, %24, %cst_18 {dimension_numbers = #tpu.dot_dimension_numbers<[1], [0], [0], [1], [0, 0, 1, 1], [], []>} : vector<8x128xbf16>, vector<128x128xbf16>, vector<8x128xf32> -> vector<8x128xf32>
    %c0_19 = arith.constant 0 : index
    %c0_20 = arith.constant 0 : index
    %26 = vector.load %arg7[%c0_19, %c0_20] : memref<1x128xf32, #tpu.memory_space<vmem>>, vector<1x128xf32>
    %27 = vector.broadcast %26 : vector<1x128xf32> to vector<8x128xf32>
    %28 = arith.addf %25, %27 : vector<8x128xf32>
    %cst_21 = arith.constant 0.000000e+00 : f32
    %29 = vector.broadcast %cst_21 : f32 to vector<8x128xf32>
    %30 = arith.cmpf ogt, %28, %29 : vector<8x128xf32>
    %cst_22 = arith.constant 0.00999999977 : f32
    %31 = vector.broadcast %cst_22 : f32 to vector<8x128xf32>
    %32 = arith.mulf %31, %28 : vector<8x128xf32>
    %33 = arith.select %30, %28, %32 : vector<8x128xi1>, vector<8x128xf32>
    %c0_23 = arith.constant 0 : index
    %c0_24 = arith.constant 0 : index
    %34 = vector.load %arg9[%c0_23, %c0_24] : memref<8x128xf32, #tpu.memory_space<vmem>>, vector<8x128xf32>
    tpu.vector_store %arg9[%c0_23, %c0_24], %33 {strides = array<i32>} : memref<8x128xf32, #tpu.memory_space<vmem>>, vector<8x128xf32>,
    return
  }
  func.func @transform_0(%arg0: i32) -> (i32, i32) {
    %c0_i32 = arith.constant 0 : i32
    %c0_i32_0 = arith.constant 0 : i32
    return %arg0, %c0_i32 : i32, i32
  }
  func.func @transform_1(%arg0: i32) -> (i32, i32) {
    %c0_i32 = arith.constant 0 : i32
    %c0_i32_0 = arith.constant 0 : i32
    %c0_i32_1 = arith.constant 0 : i32
    return %c0_i32, %c0_i32_0 : i32, i32
  }
  func.func @transform_2(%arg0: i32) -> (i32, i32) {
    %c0_i32 = arith.constant 0 : i32
    %c0_i32_0 = arith.constant 0 : i32
    %c0_i32_1 = arith.constant 0 : i32
    return %c0_i32, %c0_i32_0 : i32, i32
  }
  func.func @transform_3(%arg0: i32) -> (i32, i32) {
    %c0_i32 = arith.constant 0 : i32
    %c0_i32_0 = arith.constant 0 : i32
    %c0_i32_1 = arith.constant 0 : i32
    return %c0_i32, %c0_i32_0 : i32, i32
  }
  func.func @transform_4(%arg0: i32) -> (i32, i32) {
    %c0_i32 = arith.constant 0 : i32
    %c0_i32_0 = arith.constant 0 : i32
    %c0_i32_1 = arith.constant 0 : i32
    return %c0_i32, %c0_i32_0 : i32, i32
  }
  func.func @transform_5(%arg0: i32) -> (i32, i32) {
    %c0_i32 = arith.constant 0 : i32
    %c0_i32_0 = arith.constant 0 : i32
    %c0_i32_1 = arith.constant 0 : i32
    return %c0_i32, %c0_i32_0 : i32, i32
  }
  func.func @transform_6(%arg0: i32) -> (i32, i32) {
    %c0_i32 = arith.constant 0 : i32
    %c0_i32_0 = arith.constant 0 : i32
    %c0_i32_1 = arith.constant 0 : i32
    return %c0_i32, %c0_i32_0 : i32, i32
  }
  func.func @transform_7(%arg0: i32) -> (i32, i32) {
    %c0_i32 = arith.constant 0 : i32
    %c0_i32_0 = arith.constant 0 : i32
    return %arg0, %c0_i32 : i32, i32
  }
  func.func @transform_8(%arg0: i32) -> (i32, i32) {
    %c0_i32 = arith.constant 0 : i32
    %c0_i32_0 = arith.constant 0 : i32
    return %arg0, %c0_i32 : i32, i32
  }
}

</mosaic_0001>

<llo_original>
// kernel: classifier_forward.1
$region0: #{classifier_forward.1}
  #allocation0 [shape = 'u32[]', space=smem, size = 0x4, offset = 0x4, fixed_abs, tag = 'smem constant byte address 0x4 - core index']
  #allocation1 [shape = 'u32[144,128]{1,0:T(1,128)}', space=vmem, size = 0x12000, scoped, tag = 'internal scratch']
  %s0 = inlined_call_operand.vmem [shape: bf16[8,256], index: 0, kind: input, shape index: {}]
  %s1 = inlined_call_operand.vmem [shape: bf16[256,128], index: 1, kind: input, shape index: {}]
  %s2 = inlined_call_operand.vmem [shape: f32[1,128], index: 2, kind: input, shape index: {}]
  %s3 = inlined_call_operand.vmem [shape: bf16[128,128], index: 3, kind: input, shape index: {}]
  %s4 = inlined_call_operand.vmem [shape: f32[1,128], index: 4, kind: input, shape index: {}]
  %s5 = inlined_call_operand.vmem [shape: bf16[128,128], index: 5, kind: input, shape index: {}]
  %s6 = inlined_call_operand.vmem [shape: f32[1,128], index: 6, kind: input, shape index: {}]
  %s7 = inlined_call_operand.hbm [shape: f32[8,128], index: 7, kind: output, shape index: {0}]
  %s8 = inlined_call_operand.hbm [shape: f32[8,128], index: 8, kind: output, shape index: {1}]
  %9 = xla_tuple %s7, %s8
  %s10 = sld [smem:[#allocation0]]
  $region46: #{classifier_forward.1} parent=0
    _
  %s12 = ssub.s32 1, %s10
  %s13 = scalar_select 0, %s12, %s10
  $region1: #{classifier_forward.1} parent=0
    #allocation2 [shape = 'u8[4096]{0}', space=vmem, size = 0x1000, scoped, tag = 'output window, operand 0, single buffered']
    #allocation3 [shape = 's32[1]{0}', space=sflag, size = 0x4, scoped, tag = 'scoped memory for classifier_forward.1']
    #allocation4 [shape = 'u8[4096]{0}', space=vmem, size = 0x1000, scoped, tag = 'output window, operand 1, single buffered']
    #allocation5 [shape = 's32[1]{0}', space=sflag, size = 0x4, scoped, tag = 'scoped memory for classifier_forward.1']
    %14 = vsyncpa [#allocation3], 0
    %15 = vsyncpa [#allocation5], 0
    // Predicated region
    $region2: #{classifier_forward.1} parent=1 // pred_check
      _
    $region3: #{classifier_forward.1} parent=1 // pred_check_branch
      %17 = sbr.rel (0) target = $region5
    $region4: #{classifier_forward.1} parent=1 // pred_region
      _
    $region5: #{classifier_forward.1} parent=1 // pred_fallthru
      _
    // Predicated region
    $region6: #{classifier_forward.1} parent=1 // pred_check
      _
    $region7: #{classifier_forward.1} parent=1 // pred_check_branch
      %19 = sbr.rel (0) target = $region9
    $region8: #{classifier_forward.1} parent=1 // pred_region
      _
    $region9: #{classifier_forward.1} parent=1 // pred_fallthru
      _
    // Predicated region
    $region10: #{classifier_forward.1} parent=1 // pred_check
      _
    $region11: #{classifier_forward.1} parent=1 // pred_check_branch
      %21 = sbr.rel (0) target = $region13
    $region12: #{classifier_forward.1} parent=1 // pred_region
      _
    $region13: #{classifier_forward.1} parent=1 // pred_fallthru
      _
    // Predicated region
    $region14: #{classifier_forward.1} parent=1 // pred_check
      _
    $region15: #{classifier_forward.1} parent=1 // pred_check_branch
      %23 = sbr.rel (0) target = $region17
    $region16: #{classifier_forward.1} parent=1 // pred_region
      _
    $region17: #{classifier_forward.1} parent=1 // pred_fallthru
      _
    // Predicated region
    $region18: #{classifier_forward.1} parent=1 // pred_check
      _
    $region19: #{classifier_forward.1} parent=1 // pred_check_branch
      %25 = sbr.rel (0) target = $region21
    $region20: #{classifier_forward.1} parent=1 // pred_region
      _
    $region21: #{classifier_forward.1} parent=1 // pred_fallthru
      _
    // Predicated region
    $region22: #{classifier_forward.1} parent=1 // pred_check
      _
    $region23: #{classifier_forward.1} parent=1 // pred_check_branch
      %27 = sbr.rel (0) target = $region25
    $region24: #{classifier_forward.1} parent=1 // pred_region
      _
    $region25: #{classifier_forward.1} parent=1 // pred_fallthru
      _
    // Predicated region
    $region26: #{classifier_forward.1} parent=1 // pred_check
      _
    $region27: #{classifier_forward.1} parent=1 // pred_check_branch
      %29 = sbr.rel (0) target = $region29
    $region28: #{classifier_forward.1} parent=1 // pred_region
      _
    $region29: #{classifier_forward.1} parent=1 // pred_fallthru
      _
    %v31 = vld [vmem:[%s0] sm:$0xff]
    %v32 = vld [vmem:[%s1] sm:$0xf]
    %v33 = vld [vmem:[%s1 + $0x4] sm:$0xf]
    %v34 = vld [vmem:[%s1 + $0x8] sm:$0xf]
    %v35 = vld [vmem:[%s1 + $0xc] sm:$0xf]
    %v36 = vld [vmem:[%s1 + $0x10] sm:$0xf]
    %v37 = vld [vmem:[%s1 + $0x14] sm:$0xf]
    %v38 = vld [vmem:[%s1 + $0x18] sm:$0xf]
    %v39 = vld [vmem:[%s1 + $0x1c] sm:$0xf]
    %v40 = vld [vmem:[%s1 + $0x20] sm:$0xf]
    %v41 = vld [vmem:[%s1 + $0x24] sm:$0xf]
    %v42 = vld [vmem:[%s1 + $0x28] sm:$0xf]
    %v43 = vld [vmem:[%s1 + $0x2c] sm:$0xf]
    %v44 = vld [vmem:[%s1 + $0x30] sm:$0xf]
    %v45 = vld [vmem:[%s1 + $0x34] sm:$0xf]
    %v46 = vld [vmem:[%s1 + $0x38] sm:$0xf]
    %v47 = vld [vmem:[%s1 + $0x3c] sm:$0xf]
    %v48 = vld [vmem:[%s1 + $0x40] sm:$0xf]
    %v49 = vld [vmem:[%s1 + $0x44] sm:$0xf]
    %v50 = vld [vmem:[%s1 + $0x48] sm:$0xf]
    %v51 = vld [vmem:[%s1 + $0x4c] sm:$0xf]
    %v52 = vld [vmem:[%s1 + $0x50] sm:$0xf]
    %v53 = vld [vmem:[%s1 + $0x54] sm:$0xf]
    %v54 = vld [vmem:[%s1 + $0x58] sm:$0xf]
    %v55 = vld [vmem:[%s1 + $0x5c] sm:$0xf]
    %v56 = vld [vmem:[%s1 + $0x60] sm:$0xf]
    %v57 = vld [vmem:[%s1 + $0x64] sm:$0xf]
    %v58 = vld [vmem:[%s1 + $0x68] sm:$0xf]
    %v59 = vld [vmem:[%s1 + $0x6c] sm:$0xf]
    %v60 = vld [vmem:[%s1 + $0x70] sm:$0xf]
    %v61 = vld [vmem:[%s1 + $0x74] sm:$0xf]
    %v62 = vld [vmem:[%s1 + $0x78] sm:$0xf]
    %v63 = vld [vmem:[%s1 + $0x7c] sm:$0xf]
    %v64 = vld [vmem:[%s2] sm:$0x1]
    %v66 = vlaneseq
    %v67 = vshrl.u32 %v66, 7
    %v68 = vsub.s32 0, %v67
    %v69 = vrot.slane %v64, %v68
    %v72 = vunpack.c.l.b16 %v31
    %v73 = vunpack.c.h.b16 %v31
    %v74 = vpack.c.b16 %v72, %v72
    %v75 = vpack.c.b16 %v73, %v73
    %v110 = vunpack.c.l.b16 %v32
    %v111 = vunpack.c.l.b16 %v33
    %v112 = vunpack.c.l.b16 %v34
    %v113 = vunpack.c.l.b16 %v35
    %v114 = vunpack.c.l.b16 %v36
    %v115 = vunpack.c.l.b16 %v37
    %v116 = vunpack.c.l.b16 %v38
    %v117 = vunpack.c.l.b16 %v39
    %v118 = vunpack.c.l.b16 %v40
    %v119 = vunpack.c.l.b16 %v41
    %v120 = vunpack.c.l.b16 %v42
    %v121 = vunpack.c.l.b16 %v43
    %v122 = vunpack.c.l.b16 %v44
    %v123 = vunpack.c.l.b16 %v45
    %v124 = vunpack.c.l.b16 %v46
    %v125 = vunpack.c.l.b16 %v47
    %v126 = vunpack.c.l.b16 %v48
    %v127 = vunpack.c.l.b16 %v49
    %v128 = vunpack.c.l.b16 %v50
    %v129 = vunpack.c.l.b16 %v51
    %v130 = vunpack.c.l.b16 %v52
    %v131 = vunpack.c.l.b16 %v53
    %v132 = vunpack.c.l.b16 %v54
    %v133 = vunpack.c.l.b16 %v55
    %v134 = vunpack.c.l.b16 %v56
    %v135 = vunpack.c.l.b16 %v57
    %v136 = vunpack.c.l.b16 %v58
    %v137 = vunpack.c.l.b16 %v59
    %v138 = vunpack.c.l.b16 %v60
    %v139 = vunpack.c.l.b16 %v61
    %v140 = vunpack.c.l.b16 %v62
    %v141 = vunpack.c.l.b16 %v63
    %v142 = vpack.c.b16 %v111, %v110
    %v143 = vpack.c.b16 %v113, %v112
    %v144 = vpack.c.b16 %v115, %v114
    %v145 = vpack.c.b16 %v117, %v116
    %v146 = vpack.c.b16 %v119, %v118
    %v147 = vpack.c.b16 %v121, %v120
    %v148 = vpack.c.b16 %v123, %v122
    %v149 = vpack.c.b16 %v125, %v124
    %v150 = vpack.c.b16 %v127, %v126
    %v151 = vpack.c.b16 %v129, %v128
    %v152 = vpack.c.b16 %v131, %v130
    %v153 = vpack.c.b16 %v133, %v132
    %v154 = vpack.c.b16 %v135, %v134
    %v155 = vpack.c.b16 %v137, %v136
    %v156 = vpack.c.b16 %v139, %v138
    %v157 = vpack.c.b16 %v141, %v140
    %174 = vmatprep.subr.bf16.mxu0 0
    %175 = vmatpush1.bf16.msra.mxu0 %v149
    %176 = vmatprep.subr.bf16.mxu0 0
    %177 = vmatpush1.bf16.msra.mxu0 %v148
    %178 = vmatprep.subr.bf16.mxu0 0
    %179 = vmatpush1.bf16.msra.mxu0 %v147
    %180 = vmatprep.subr.bf16.mxu0 0
    %181 = vmatpush1.bf16.msra.mxu0 %v146
    %182 = vmatprep.subr.bf16.mxu0 0
    %183 = vmatpush1.bf16.msra.mxu0 %v145
    %184 = vmatprep.subr.bf16.mxu0 0
    %185 = vmatpush1.bf16.msra.mxu0 %v144
    %186 = vmatprep.subr.bf16.mxu0 0
    %187 = vmatpush1.bf16.msra.mxu0 %v143
    %188 = vmatprep.subr.bf16.mxu0 0
    %189 = vmatpush1.bf16.msra.mxu0 %v142
    %190 = vmatprep.subr.bf16.mxu0 0
    %191 = vmatpush2.bf16.msra.mxu0 %v157
    %192 = vmatprep.subr.bf16.mxu0 0
    %193 = vmatpush2.bf16.msra.mxu0 %v156
    %194 = vmatprep.subr.bf16.mxu0 0
    %195 = vmatpush2.bf16.msra.mxu0 %v155
    %196 = vmatprep.subr.bf16.mxu0 0
    %197 = vmatpush2.bf16.msra.mxu0 %v154
    %198 = vmatprep.subr.bf16.mxu0 0
    %199 = vmatpush2.bf16.msra.mxu0 %v153
    %200 = vmatprep.subr.bf16.mxu0 0
    %201 = vmatpush2.bf16.msra.mxu0 %v152
    %202 = vmatprep.subr.bf16.mxu0 0
    %203 = vmatpush2.bf16.msra.mxu0 %v151
    %204 = vmatprep.subr.bf16.mxu0 0
    %205 = vmatpush2.bf16.msra.mxu0 %v150
    %206 = vmatprep.mubr.bf16.mxu0 %v75
    %207 = vmatmul.mubr.bf16.gmra.mxu0 %v74
    %v208 = vpop.f32.mrf.mxu0
    %v209 = vadd.f32 %v69, %v208
    %v210 = vpop.f32.mrf.mxu0
    %v211 = vpop.f32.mrf.mxu0
    %v212 = vpop.f32.mrf.mxu0
    %213 = vdwg.mxu0
    %vm214 = vcmp.gt.f32.partialorder %v209, 0.0
    %v215 = vmul.f32 %v209, 0.01
    %v216 = vsel %vm214, %v209, %v215
    %v217 = vpack.c.bf16 %v216, %v216
    %v218 = vld [vmem:[%s3] sm:$0xf]
    %v219 = vld [vmem:[%s3 + $0x4] sm:$0xf]
    %v220 = vld [vmem:[%s3 + $0x8] sm:$0xf]
    %v221 = vld [vmem:[%s3 + $0xc] sm:$0xf]
    %v222 = vld [vmem:[%s3 + $0x10] sm:$0xf]
    %v223 = vld [vmem:[%s3 + $0x14] sm:$0xf]
    %v224 = vld [vmem:[%s3 + $0x18] sm:$0xf]
    %v225 = vld [vmem:[%s3 + $0x1c] sm:$0xf]
    %v226 = vld [vmem:[%s3 + $0x20] sm:$0xf]
    %v227 = vld [vmem:[%s3 + $0x24] sm:$0xf]
    %v228 = vld [vmem:[%s3 + $0x28] sm:$0xf]
    %v229 = vld [vmem:[%s3 + $0x2c] sm:$0xf]
    %v230 = vld [vmem:[%s3 + $0x30] sm:$0xf]
    %v231 = vld [vmem:[%s3 + $0x34] sm:$0xf]
    %v232 = vld [vmem:[%s3 + $0x38] sm:$0xf]
    %v233 = vld [vmem:[%s3 + $0x3c] sm:$0xf]
    %v234 = vld [vmem:[%s4] sm:$0x1]
    %v236 = vlaneseq
    %v237 = vshrl.u32 %v236, 7
    %v238 = vsub.s32 0, %v237
    %v239 = vrot.slane %v234, %v238
    %v257 = vunpack.c.l.b16 %v218
    %v258 = vunpack.c.l.b16 %v219
    %v259 = vunpack.c.l.b16 %v220
    %v260 = vunpack.c.l.b16 %v221
    %v261 = vunpack.c.l.b16 %v222
    %v262 = vunpack.c.l.b16 %v223
    %v263 = vunpack.c.l.b16 %v224
    %v264 = vunpack.c.l.b16 %v225
    %v265 = vunpack.c.l.b16 %v226
    %v266 = vunpack.c.l.b16 %v227
    %v267 = vunpack.c.l.b16 %v228
    %v268 = vunpack.c.l.b16 %v229
    %v269 = vunpack.c.l.b16 %v230
    %v270 = vunpack.c.l.b16 %v231
    %v271 = vunpack.c.l.b16 %v232
    %v272 = vunpack.c.l.b16 %v233
    %v273 = vpack.c.b16 %v258, %v257
    %v274 = vpack.c.b16 %v260, %v259
    %v275 = vpack.c.b16 %v262, %v261
    %v276 = vpack.c.b16 %v264, %v263
    %v277 = vpack.c.b16 %v266, %v265
    %v278 = vpack.c.b16 %v268, %v267
    %v279 = vpack.c.b16 %v270, %v269
    %v280 = vpack.c.b16 %v272, %v271
    %289 = vmatprep.subr.bf16.mxu0 0
    %290 = vmatpush1.bf16.msra.mxu0 %v280
    %291 = vmatprep.subr.bf16.mxu0 0
    %292 = vmatpush1.bf16.msra.mxu0 %v279
    %293 = vmatprep.subr.bf16.mxu0 0
    %294 = vmatpush1.bf16.msra.mxu0 %v278
    %295 = vmatprep.subr.bf16.mxu0 0
    %296 = vmatpush1.bf16.msra.mxu0 %v277
    %297 = vmatprep.subr.bf16.mxu0 0
    %298 = vmatpush1.bf16.msra.mxu0 %v276
    %299 = vmatprep.subr.bf16.mxu0 0
    %300 = vmatpush1.bf16.msra.mxu0 %v275
    %301 = vmatprep.subr.bf16.mxu0 0
    %302 = vmatpush1.bf16.msra.mxu0 %v274
    %303 = vmatprep.subr.bf16.mxu0 0
    %304 = vmatpush1.bf16.msra.mxu0 %v273
    %305 = vmatprep.subr.bf16.mxu0 0
    %306 = vmatpush2.bf16.msra.mxu0 0
    %307 = vmatprep.subr.bf16.mxu0 0
    %308 = vmatpush2.bf16.msra.mxu0 0
    %309 = vmatprep.subr.bf16.mxu0 0
    %310 = vmatpush2.bf16.msra.mxu0 0
    %311 = vmatprep.subr.bf16.mxu0 0
    %312 = vmatpush2.bf16.msra.mxu0 0
    %313 = vmatprep.subr.bf16.mxu0 0
    %314 = vmatpush2.bf16.msra.mxu0 0
    %315 = vmatprep.subr.bf16.mxu0 0
    %316 = vmatpush2.bf16.msra.mxu0 0
    %317 = vmatprep.subr.bf16.mxu0 0
    %318 = vmatpush2.bf16.msra.mxu0 0
    %319 = vmatprep.subr.bf16.mxu0 0
    %320 = vmatpush2.bf16.msra.mxu0 0
    %321 = vmatprep.mubr.bf16.mxu0 0
    %322 = vmatmul.mubr.bf16.gmra.mxu0 %v217
    %v323 = vpop.f32.mrf.mxu0
    %v324 = vadd.f32 %v239, %v323
    %v325 = vpop.f32.mrf.mxu0
    %v326 = vpop.f32.mrf.mxu0
    %v327 = vpop.f32.mrf.mxu0
    %328 = vdwg.mxu0
    %vm329 = vcmp.gt.f32.partialorder %v324, 0.0
    %v330 = vmul.f32 %v324, 0.01
    %v331 = vsel %vm329, %v324, %v330
    %332 = vst [vmem:[#allocation2] sm:$0xff] %v331
    %v333 = vpack.c.bf16 %v331, %v331
    %v334 = vld [vmem:[%s5] sm:$0xf]
    %v335 = vld [vmem:[%s5 + $0x4] sm:$0xf]
    %v336 = vld [vmem:[%s5 + $0x8] sm:$0xf]
    %v337 = vld [vmem:[%s5 + $0xc] sm:$0xf]
    %v338 = vld [vmem:[%s5 + $0x10] sm:$0xf]
    %v339 = vld [vmem:[%s5 + $0x14] sm:$0xf]
    %v340 = vld [vmem:[%s5 + $0x18] sm:$0xf]
    %v341 = vld [vmem:[%s5 + $0x1c] sm:$0xf]
    %v342 = vld [vmem:[%s5 + $0x20] sm:$0xf]
    %v343 = vld [vmem:[%s5 + $0x24] sm:$0xf]
    %v344 = vld [vmem:[%s5 + $0x28] sm:$0xf]
    %v345 = vld [vmem:[%s5 + $0x2c] sm:$0xf]
    %v346 = vld [vmem:[%s5 + $0x30] sm:$0xf]
    %v347 = vld [vmem:[%s5 + $0x34] sm:$0xf]
    %v348 = vld [vmem:[%s5 + $0x38] sm:$0xf]
    %v349 = vld [vmem:[%s5 + $0x3c] sm:$0xf]
    %v350 = vld [vmem:[%s6] sm:$0x1]
    %v352 = vlaneseq
    %v353 = vshrl.u32 %v352, 7
    %v354 = vsub.s32 0, %v353
    %v355 = vrot.slane %v350, %v354
    %v373 = vunpack.c.l.b16 %v334
    %v374 = vunpack.c.l.b16 %v335
    %v375 = vunpack.c.l.b16 %v336
    %v376 = vunpack.c.l.b16 %v337
    %v377 = vunpack.c.l.b16 %v338
    %v378 = vunpack.c.l.b16 %v339
    %v379 = vunpack.c.l.b16 %v340
    %v380 = vunpack.c.l.b16 %v341
    %v381 = vunpack.c.l.b16 %v342
    %v382 = vunpack.c.l.b16 %v343
    %v383 = vunpack.c.l.b16 %v344
    %v384 = vunpack.c.l.b16 %v345
    %v385 = vunpack.c.l.b16 %v346
    %v386 = vunpack.c.l.b16 %v347
    %v387 = vunpack.c.l.b16 %v348
    %v388 = vunpack.c.l.b16 %v349
    %v389 = vpack.c.b16 %v374, %v373
    %v390 = vpack.c.b16 %v376, %v375
    %v391 = vpack.c.b16 %v378, %v377
    %v392 = vpack.c.b16 %v380, %v379
    %v393 = vpack.c.b16 %v382, %v381
    %v394 = vpack.c.b16 %v384, %v383
    %v395 = vpack.c.b16 %v386, %v385
    %v396 = vpack.c.b16 %v388, %v387
    %405 = vmatprep.subr.bf16.mxu0 0
    %406 = vmatpush1.bf16.msra.mxu0 %v396
    %407 = vmatprep.subr.bf16.mxu0 0
    %408 = vmatpush1.bf16.msra.mxu0 %v395
    %409 = vmatprep.subr.bf16.mxu0 0
    %410 = vmatpush1.bf16.msra.mxu0 %v394
    %411 = vmatprep.subr.bf16.mxu0 0
    %412 = vmatpush1.bf16.msra.mxu0 %v393
    %413 = vmatprep.subr.bf16.mxu0 0
    %414 = vmatpush1.bf16.msra.mxu0 %v392
    %415 = vmatprep.subr.bf16.mxu0 0
    %416 = vmatpush1.bf16.msra.mxu0 %v391
    %417 = vmatprep.subr.bf16.mxu0 0
    %418 = vmatpush1.bf16.msra.mxu0 %v390
    %419 = vmatprep.subr.bf16.mxu0 0
    %420 = vmatpush1.bf16.msra.mxu0 %v389
    %421 = vmatprep.subr.bf16.mxu0 0
    %422 = vmatpush2.bf16.msra.mxu0 0
    %423 = vmatprep.subr.bf16.mxu0 0
    %424 = vmatpush2.bf16.msra.mxu0 0
    %425 = vmatprep.subr.bf16.mxu0 0
    %426 = vmatpush2.bf16.msra.mxu0 0
    %427 = vmatprep.subr.bf16.mxu0 0
    %428 = vmatpush2.bf16.msra.mxu0 0
    %429 = vmatprep.subr.bf16.mxu0 0
    %430 = vmatpush2.bf16.msra.mxu0 0
    %431 = vmatprep.subr.bf16.mxu0 0
    %432 = vmatpush2.bf16.msra.mxu0 0
    %433 = vmatprep.subr.bf16.mxu0 0
    %434 = vmatpush2.bf16.msra.mxu0 0
    %435 = vmatprep.subr.bf16.mxu0 0
    %436 = vmatpush2.bf16.msra.mxu0 0
    %437 = vmatprep.mubr.bf16.mxu0 0
    %438 = vmatmul.mubr.bf16.gmra.mxu0 %v333
    %v439 = vpop.f32.mrf.mxu0
    %v440 = vadd.f32 %v355, %v439
    %v441 = vpop.f32.mrf.mxu0
    %v442 = vpop.f32.mrf.mxu0
    %v443 = vpop.f32.mrf.mxu0
    %444 = vdwg.mxu0
    %vm445 = vcmp.gt.f32.partialorder %v440, 0.0
    %v446 = vmul.f32 %v440, 0.01
    %v447 = vsel %vm445, %v440, %v446
    %448 = vst [vmem:[#allocation4] sm:$0xff] %v447
    // Predicated region
    $region30: #{classifier_forward.1} parent=1 // pred_check
      _
    $region31: #{classifier_forward.1} parent=1 // pred_check_branch
      %450 = sbr.rel (0) target = $region33
    $region32: #{classifier_forward.1} parent=1 // pred_region
      %s452 = ssub.s32 128, 128
      %453 = vsyncadd [#allocation3], %s452
      %s455 = sshll.u32 [#allocation2], 4
      %s456 = int_to_ptr.vmem [resolvable:$true] %s455
      %458 = dma.vmem_to_hbm [thread:$0]  %s456, 128, %s7, [#allocation3]
    $region33: #{classifier_forward.1} parent=1 // pred_fallthru
      _
    // Predicated region
    $region34: #{classifier_forward.1} parent=1 // pred_check
      _
    $region35: #{classifier_forward.1} parent=1 // pred_check_branch
      %460 = sbr.rel (0) target = $region37
    $region36: #{classifier_forward.1} parent=1 // pred_region
      %s462 = ssub.s32 128, 128
      %463 = vsyncadd [#allocation5], %s462
      %s465 = sshll.u32 [#allocation4], 4
      %s466 = int_to_ptr.vmem [resolvable:$true] %s465
      %468 = dma.vmem_to_hbm [thread:$0]  %s466, 128, %s8, [#allocation5]
    $region37: #{classifier_forward.1} parent=1 // pred_fallthru
      _
    // Predicated region
    $region38: #{classifier_forward.1} parent=1 // pred_check
      _
    $region39: #{classifier_forward.1} parent=1 // pred_check_branch
      %470 = sbr.rel (0) target = $region41
    $region40: #{classifier_forward.1} parent=1 // pred_region
      %471 = dma.done [#allocation3], 128
    $region41: #{classifier_forward.1} parent=1 // pred_fallthru
      _
    // Predicated region
    $region42: #{classifier_forward.1} parent=1 // pred_check
      _
    $region43: #{classifier_forward.1} parent=1 // pred_check_branch
      %473 = sbr.rel (0) target = $region45
    $region44: #{classifier_forward.1} parent=1 // pred_region
      %474 = dma.done [#allocation5], 128
    $region45: #{classifier_forward.1} parent=1 // pred_fallthru
      _
    %475 = vsyncpa [#allocation3], 1
    %476 = vsyncpa [#allocation5], 1

</llo_original>
